<compile_context>
chip_gen: v6e
topology: v6e:2x2x1
jax: 0.10.0
libtpu: 0.0.40
codegen_flags: <defaults>
</compile_context>

<pallas_src>
import jax
import jax.numpy as jnp
from jax.experimental import pallas as pl
from jax.experimental.pallas import tpu as pltpu


def linear_kernel(x_ref, w_ref, b_ref, o_ref):
    # MXU matmul with f32 accumulation; bias add on the f32 accumulator
    # (no narrow-dtype elementwise math -> v5e friendly), one cast at the end.
    acc = jnp.dot(x_ref[...], w_ref[...], preferred_element_type=jnp.float32)
    o_ref[...] = (acc + b_ref[...]).astype(o_ref.dtype)


def multi_outs_binary_forward(x, w_t, b, *, tm=8192):
    """y = x @ w_t + b  (equivalent to PyTorch nn.Linear with weight = w_t.T).

    x:   (M, K) activations
    w_t: (K, N) transposed Linear weight
    b:   (N,) or (1, N) bias
    """
    M, K = x.shape
    K2, N = w_t.shape
    assert K == K2, f"hidden dim mismatch: {K} vs {K2}"

    out_dtype = x.dtype
    wk = jnp.asarray(w_t).astype(x.dtype)               # tiny (K*N), match MXU input dtype
    bk = jnp.asarray(b, dtype=jnp.float32).reshape(1, N)  # f32 bias for f32 accumulator

    # Sublane alignment for the second-minor dim of the x / out tiles.
    sublane = 16 if x.dtype == jnp.bfloat16 else 8
    if tm >= M:
        tm = M                                            # full batch: single legal block
    else:
        tm = max(sublane, (tm // sublane) * sublane)      # sublane-aligned tile

    grid = (pl.cdiv(M, tm),)                              # partial last block is masked by Pallas

    y = pl.pallas_call(
        linear_kernel,
        out_shape=jax.ShapeDtypeStruct((M, N), out_dtype),
        grid_spec=pl.GridSpec(
            grid=grid,
            in_specs=[
                pl.BlockSpec((tm, K), lambda i: (i, 0)),   # x tile (batch rows), streamed
                pl.BlockSpec((K, N), lambda i: (0, 0)),    # full weight, resident
                pl.BlockSpec((1, N), lambda i: (0, 0)),    # bias, resident
            ],
            out_specs=pl.BlockSpec((tm, N), lambda i: (i, 0)),
        ),
        compiler_params=pltpu.CompilerParams(
            dimension_semantics=("parallel",),             # batch axis shardable across TCs
        ),
    )(x, wk, bk)

    return y


if __name__ == "__main__":
    # Small shapes consistent with MultiOutsBinary(hidden_dim, out_dim)
    batch, hidden_dim, out_dim = 8, 32, 4

    key = jax.random.PRNGKey(0)
    kx, kw, kb, kx2 = jax.random.split(key, 4)

    x = jax.random.normal(kx, (batch, hidden_dim), dtype=jnp.float32)
    # PyTorch Linear weight is (out, hidden); we store its transpose.
    w = jax.random.normal(kw, (out_dim, hidden_dim), dtype=jnp.float32) * 0.1
    b = jax.random.normal(kb, (out_dim,), dtype=jnp.float32) * 0.1
    w_t = w.T                        # (hidden, out)
    b2d = b.reshape(1, out_dim)      # (1, out)

    # --- small-batch path (single full-batch tile) ---
    y = multi_outs_binary_forward(x, w_t, b)
    jax.block_until_ready(y)
    assert y.shape == (batch, out_dim)
    y_ref = x @ w_t + b2d
    assert jnp.allclose(y, y_ref, atol=2e-2, rtol=2e-2), \
        f"max err {float(jnp.max(jnp.abs(y - y_ref)))}"

    # --- tiled path: non-divisible batch + small explicit tile (exercises the
    #     multi-step grid, the masked partial last block, and the parallel axis) ---
    batch2 = 300
    x2 = jax.random.normal(kx2, (batch2, hidden_dim), dtype=jnp.float32)
    y2 = multi_outs_binary_forward(x2, w_t, b, tm=64)
    jax.block_until_ready(y2)
    assert y2.shape == (batch2, out_dim)
    y2_ref = x2 @ w_t + b2d
    assert jnp.allclose(y2, y2_ref, atol=2e-2, rtol=2e-2), \
        f"max err {float(jnp.max(jnp.abs(y2 - y2_ref)))}"

    print("KERNEL_OK")
</pallas_src>

<mosaic_0001>
module attributes {stable_mosaic.version = 11 : i64} {
  func.func @linear_kernel(%arg0: i32, %arg1: memref<8x32xf32, #tpu.memory_space<vmem>>, %arg2: memref<32x4xf32, #tpu.memory_space<vmem>>, %arg3: memref<1x4xf32, #tpu.memory_space<vmem>>, %arg4: memref<8x4xf32, #tpu.memory_space<vmem>>) attributes {dimension_semantics = [#tpu.dimension_semantics<parallel>], iteration_bounds = array<i64: 1>, scalar_prefetch = 0 : i64, scratch_operands = 0 : i64, tpu.core_type = #tpu.core_type<tc>, window_params = [{transform_indices = @transform_0, window_bounds = array<i64: 8, 32>}, {pipeline_mode = #tpu.pipeline_mode<synchronous>, transform_indices = @transform_1, window_bounds = array<i64: 32, 4>}, {pipeline_mode = #tpu.pipeline_mode<synchronous>, transform_indices = @transform_2, window_bounds = array<i64: 1, 4>}, {transform_indices = @transform_3, window_bounds = array<i64: 8, 4>}]} {
    %c0 = arith.constant 0 : index
    %c0_0 = arith.constant 0 : index
    %0 = vector.load %arg1[%c0, %c0_0] : memref<8x32xf32, #tpu.memory_space<vmem>>, vector<8x32xf32>
    %c0_1 = arith.constant 0 : index
    %c0_2 = arith.constant 0 : index
    %1 = vector.load %arg2[%c0_1, %c0_2] : memref<32x4xf32, #tpu.memory_space<vmem>>, vector<32x4xf32>
    %cst = arith.constant dense<0.000000e+00> : vector<8x4xf32>
    %2 = tpu.matmul %0, %1, %cst {dimension_numbers = #tpu.dot_dimension_numbers<[1], [0], [0], [1], [0, 0, 1, 1], [], []>} : vector<8x32xf32>, vector<32x4xf32>, vector<8x4xf32> -> vector<8x4xf32>
    %c0_3 = arith.constant 0 : index
    %c0_4 = arith.constant 0 : index
    %3 = vector.load %arg3[%c0_3, %c0_4] : memref<1x4xf32, #tpu.memory_space<vmem>>, vector<1x4xf32>
    %4 = vector.broadcast %3 : vector<1x4xf32> to vector<8x4xf32>
    %5 = arith.addf %2, %4 : vector<8x4xf32>
    %c0_5 = arith.constant 0 : index
    %c0_6 = arith.constant 0 : index
    %6 = vector.load %arg4[%c0_5, %c0_6] : memref<8x4xf32, #tpu.memory_space<vmem>>, vector<8x4xf32>
    tpu.vector_store %arg4[%c0_5, %c0_6], %5 {strides = array<i32>} : memref<8x4xf32, #tpu.memory_space<vmem>>, vector<8x4xf32>,
    return
  }
  func.func @transform_0(%arg0: i32) -> (i32, i32) {
    %c0_i32 = arith.constant 0 : i32
    %c0_i32_0 = arith.constant 0 : i32
    return %arg0, %c0_i32 : i32, i32
  }
  func.func @transform_1(%arg0: i32) -> (i32, i32) {
    %c0_i32 = arith.constant 0 : i32
    %c0_i32_0 = arith.constant 0 : i32
    %c0_i32_1 = arith.constant 0 : i32
    return %c0_i32, %c0_i32_0 : i32, i32
  }
  func.func @transform_2(%arg0: i32) -> (i32, i32) {
    %c0_i32 = arith.constant 0 : i32
    %c0_i32_0 = arith.constant 0 : i32
    %c0_i32_1 = arith.constant 0 : i32
    return %c0_i32, %c0_i32_0 : i32, i32
  }
  func.func @transform_3(%arg0: i32) -> (i32, i32) {
    %c0_i32 = arith.constant 0 : i32
    %c0_i32_0 = arith.constant 0 : i32
    return %arg0, %c0_i32 : i32, i32
  }
}

</mosaic_0001>

<llo_original>
// kernel: tpu_custom_call.1
$region0: #{tpu_custom_call.1}
  #allocation0 [shape = 'u32[]', space=smem, size = 0x4, offset = 0x4, fixed_abs, tag = 'smem constant byte address 0x4 - core index']
  #allocation1 [shape = 'u32[144,128]{1,0:T(1,128)}', space=vmem, size = 0x12000, scoped, tag = 'internal scratch']
  %s0 = inlined_call_operand.vmem [shape: f32[8,32], index: 0, kind: input, shape index: {}]
  %s1 = inlined_call_operand.vmem [shape: f32[32,4], index: 1, kind: input, shape index: {}]
  %s2 = inlined_call_operand.vmem [shape: f32[1,4], index: 2, kind: input, shape index: {}]
  %s3 = inlined_call_operand.vmem [shape: f32[8,4], index: 3, kind: output, shape index: {}]
  %s4 = sld [smem:[#allocation0]]
  $region22: #{tpu_custom_call.1} parent=0
    _
  %s6 = ssub.s32 1, %s4
  %s7 = scalar_select 0, %s6, %s4
  // Predicated region
  $region2: #{tpu_custom_call.1} parent=0 // pred_check
    _
  $region3: #{tpu_custom_call.1} parent=0 // pred_check_branch
    %9 = sbr.rel (0) target = $region5
  $region4: #{tpu_custom_call.1} parent=0 // pred_region
    _
  $region5: #{tpu_custom_call.1} parent=0 // pred_fallthru
    _
  // Predicated region
  $region6: #{tpu_custom_call.1} parent=0 // pred_check
    _
  $region7: #{tpu_custom_call.1} parent=0 // pred_check_branch
    %11 = sbr.rel (0) target = $region9
  $region8: #{tpu_custom_call.1} parent=0 // pred_region
    _
  $region9: #{tpu_custom_call.1} parent=0 // pred_fallthru
    _
  // Predicated region
  $region10: #{tpu_custom_call.1} parent=0 // pred_check
    _
  $region11: #{tpu_custom_call.1} parent=0 // pred_check_branch
    %13 = sbr.rel (0) target = $region13
  $region12: #{tpu_custom_call.1} parent=0 // pred_region
    _
  $region13: #{tpu_custom_call.1} parent=0 // pred_fallthru
    _
  %v14 = vld [vmem:[%s0] sm:$0xff]
  %v15 = vld [vmem:[%s1] sm:$0xff]
  %v16 = vld [vmem:[%s1 + $0x8] sm:$0xff]
  %v17 = vld [vmem:[%s1 + $0x10] sm:$0xff]
  %v18 = vld [vmem:[%s1 + $0x18] sm:$0xff]
  %v19 = vld [vmem:[%s2] sm:$0x1]
  %v21 = vlaneseq
  %v22 = vshrl.u32 %v21, 7
  %v23 = vsub.s32 0, %v22
  %v24 = vrot.slane %v19, %v23
  %vm26 = vcmask 261120
  %v28 = vsel %vm26, %v14, 0
  %30 = vmatprep.subr.mxu0 0.0
  %31 = vmatpush1.msra.mxu0 0.0
  %32 = vmatprep.subr.mxu0 0.0
  %33 = vmatpush1.msra.mxu0 0.0
  %34 = vmatprep.subr.mxu0 0.0
  %35 = vmatpush1.msra.mxu0 0.0
  %36 = vmatprep.subr.mxu0 0.0
  %37 = vmatpush1.msra.mxu0 0.0
  %38 = vmatprep.subr.mxu0 0.0
  %39 = vmatpush1.msra.mxu0 0.0
  %40 = vmatprep.subr.mxu0 0.0
  %41 = vmatpush1.msra.mxu0 0.0
  %42 = vmatprep.subr.mxu0 0.0
  %43 = vmatpush1.msra.mxu0 0.0
  %44 = vmatprep.subr.mxu0 0.0
  %45 = vmatpush1.msra.mxu0 0.0
  %46 = vmatprep.subr.mxu0 0.0
  %47 = vmatpush1.msra.mxu0 0.0
  %48 = vmatprep.subr.mxu0 0.0
  %49 = vmatpush1.msra.mxu0 0.0
  %50 = vmatprep.subr.mxu0 0.0
  %51 = vmatpush1.msra.mxu0 0.0
  %52 = vmatprep.subr.mxu0 0.0
  %53 = vmatpush1.msra.mxu0 0.0
  %54 = vmatprep.subr.mxu0 0.0
  %55 = vmatpush1.msra.mxu0 %v18
  %56 = vmatprep.subr.mxu0 0.0
  %57 = vmatpush1.msra.mxu0 %v17
  %58 = vmatprep.subr.mxu0 0.0
  %59 = vmatpush1.msra.mxu0 %v16
  %60 = vmatprep.subr.mxu0 0.0
  %61 = vmatpush1.msra.mxu0 %v15
  %62 = vmatprep.subr.mxu0 0.0
  %63 = vmatpush2.msra.mxu0 0.0
  %64 = vmatprep.subr.mxu0 0.0
  %65 = vmatpush2.msra.mxu0 0.0
  %66 = vmatprep.subr.mxu0 0.0
  %67 = vmatpush2.msra.mxu0 0.0
  %68 = vmatprep.subr.mxu0 0.0
  %69 = vmatpush2.msra.mxu0 0.0
  %70 = vmatprep.subr.mxu0 0.0
  %71 = vmatpush2.msra.mxu0 0.0
  %72 = vmatprep.subr.mxu0 0.0
  %73 = vmatpush2.msra.mxu0 0.0
  %74 = vmatprep.subr.mxu0 0.0
  %75 = vmatpush2.msra.mxu0 0.0
  %76 = vmatprep.subr.mxu0 0.0
  %77 = vmatpush2.msra.mxu0 0.0
  %78 = vmatprep.subr.mxu0 0.0
  %79 = vmatpush2.msra.mxu0 0.0
  %80 = vmatprep.subr.mxu0 0.0
  %81 = vmatpush2.msra.mxu0 0.0
  %82 = vmatprep.subr.mxu0 0.0
  %83 = vmatpush2.msra.mxu0 0.0
  %84 = vmatprep.subr.mxu0 0.0
  %85 = vmatpush2.msra.mxu0 0.0
  %86 = vmatprep.subr.mxu0 0.0
  %87 = vmatpush2.msra.mxu0 0.0
  %88 = vmatprep.subr.mxu0 0.0
  %89 = vmatpush2.msra.mxu0 0.0
  %90 = vmatprep.subr.mxu0 0.0
  %91 = vmatpush2.msra.mxu0 0.0
  %92 = vmatprep.subr.mxu0 0.0
  %93 = vmatpush2.msra.mxu0 0.0
  %94 = vmatprep.mubr.f32.mxu0 0.0
  %95 = vmatmul.mubr.f32.gmra.mxu0 %v28
  %v96 = vpop.f32.mrf.mxu0
  %v97 = vadd.f32 %v24, %v96
  %v98 = vpop.f32.mrf.mxu0
  %99 = vdwg.mxu0
  %vm100 = vcmask 31744
  %101 = vst.msk [vmem:[%s3] sm:$0xff] %vm100, %v97
  // Predicated region
  $region14: #{tpu_custom_call.1} parent=0 // pred_check
    _
  $region15: #{tpu_custom_call.1} parent=0 // pred_check_branch
    %103 = sbr.rel (0) target = $region17
  $region16: #{tpu_custom_call.1} parent=0 // pred_region
    _
  $region17: #{tpu_custom_call.1} parent=0 // pred_fallthru
    _
  // Predicated region
  $region18: #{tpu_custom_call.1} parent=0 // pred_check
    _
  $region19: #{tpu_custom_call.1} parent=0 // pred_check_branch
    %105 = sbr.rel (0) target = $region21
  $region20: #{tpu_custom_call.1} parent=0 // pred_region
    _
  $region21: #{tpu_custom_call.1} parent=0 // pred_fallthru
    _

</llo_original>
